<compile_context>
chip_gen: v7x
topology: tpu7x:2x2x1
jax: 0.10.0
libtpu: 0.0.40
codegen_flags: <defaults>
</compile_context>

<pallas_src>
import jax
import jax.numpy as jnp
from jax.experimental import pallas as pl
from jax.experimental.pallas import tpu as pltpu


_LANE = 128      # TPU lane width (last dim)
_SUBLANE = 8     # sublane granularity for 32-bit dtypes


def _round_up(x, m):
    return ((x + m - 1) // m) * m


def _cdiv(a, b):
    return -(-a // b)


def _vmem_limit_bytes():
    """Per-TensorCore VMEM limit: 75% of the reported capacity.

    v5e/v6e report 128 MiB -> 96 MiB limit (vs. 16/32 MiB scoped defaults);
    v7x reports 64 MiB per TC -> 48 MiB, which also covers the per-core
    duplication of the resident weight under megacore sharding. Falls back to
    a conservative 64 MiB if the query is unavailable.
    """
    cap = 64 * 1024 * 1024
    try:
        info = pltpu.get_tpu_info()
        c = getattr(info, "vmem_capacity_bytes", None)
        if c:
            cap = int(c)
    except Exception:
        pass
    return (cap * 3) // 4


def _pw_kernel(x_ref, bias_ref, w_ref, o_ref):
    # x_ref:    (TN, D_in)   activation row tile
    # bias_ref: (1,  D_in)   grid-invariant (broadcast over rows)
    # w_ref:    (D_in, TJ)   pre-transposed weight column tile
    # o_ref:    (TN, TJ)     output tile (lane-dense when D_out is padded)
    centered = x_ref[...] - bias_ref[...]              # VPU, activation dtype
    o_ref[...] = jnp.dot(
        centered.astype(w_ref.dtype),                  # cast only the MXU feed
        w_ref[...],
        preferred_element_type=jnp.float32,            # f32 accumulation
    ).astype(o_ref.dtype)


def prepare_pw_params(bias, weight, param_dtype=None):
    """One-time parameter prep (do at init time, NOT per forward call).

    bias:   (D_in,)        torch PWLayer.bias
    weight: (D_out, D_in)  torch nn.Linear weight (no bias)

    Returns:
      bias_p: (1, D_in)
      w_p:    (D_in, Dout_p) pre-transposed, Dout_p = ceil(D_out/128)*128.
    D_in is intentionally NOT padded (avoids DMA-ing zero lanes of x); D_out
    is lane-padded so output stores are lane-dense. Padded weight columns are
    zero and are sliced off in the wrapper only when D_out % 128 != 0.
    param_dtype=jnp.bfloat16 halves weight HBM/VMEM traffic and uses the
    native bf16 MXU path on v6e/v7x (the f32 subtract is unaffected).
    """
    d_out, d_in = weight.shape
    if param_dtype is not None:
        weight = weight.astype(param_dtype)
    dout_p = _round_up(d_out, _LANE)
    w_p = jnp.zeros((d_in, dout_p), weight.dtype).at[:, :d_out].set(weight.T)
    bias_p = bias.reshape(1, d_in)
    return bias_p, w_p


def _choose_tiles(n, d_in, dout_p, act_bytes, w_bytes, bias_bytes, budget,
                  row_align, max_rows):
    """Pick (tn, tj): row tile and Dout tile.

    Budgets the grid-invariant W/bias at 2x (Pallas allocates pipeline buffers
    even for constant index_maps) plus double-buffered x/out tiles. Falls back
    to tiling Dout when the full weight does not fit resident.
    """

    def max_tn(tj):
        resident = 2 * (d_in * tj * w_bytes + d_in * bias_bytes)
        per_row = 2 * (d_in + tj) * act_bytes          # double-buffered x + out
        avail = budget - resident
        if avail <= 0:
            return 0
        return (int(avail // per_row) // row_align) * row_align

    tj = dout_p
    want_rows = min(256, _round_up(n, row_align))
    tn = max_tn(tj)
    while tn < want_rows and tj > _LANE:               # Dout-tiling fallback
        tj = max(_LANE, _round_up(tj // 2, _LANE))
        tn = max_tn(tj)

    tn = min(tn, max_rows, _round_up(n, row_align))
    tn = max(tn, row_align)
    # Ensure >= 2 row tiles so both TensorCores get work under megacore (v7x);
    # on single-TC chips the extra grid step costs ~0.35 us (negligible).
    if n > row_align:
        tn = min(tn, _round_up(_cdiv(n, 2), row_align))
    return tn, tj


def pw_layer_forward(x, bias_p, w_p, d_out, *, max_rows_per_tile=2048):
    """y = (x - bias) @ W.T.  x: (..., D_in).  Dropout p=0.0 -> identity.

    bias_p / w_p come from prepare_pw_params (one-time, not per call).
    """
    d_in, dout_p = w_p.shape
    assert x.shape[-1] == d_in
    lead_shape = x.shape[:-1]
    n = 1
    for s in lead_shape:
        n *= s
    x2d = x.reshape(n, d_in)                            # free: merges leading dims

    act_bytes = jnp.dtype(x.dtype).itemsize
    w_bytes = jnp.dtype(w_p.dtype).itemsize
    bias_bytes = jnp.dtype(bias_p.dtype).itemsize
    # Sub-32-bit activations pack rows along sublanes: f32 -> 8, bf16 -> 16.
    row_align = _SUBLANE * max(1, 4 // act_bytes)

    vmem_limit = _vmem_limit_bytes()
    budget = vmem_limit - (2 << 20)                     # headroom for internal scratch
    tn, tj = _choose_tiles(n, d_in, dout_p, act_bytes, w_bytes, bias_bytes,
                           budget, row_align, max_rows_per_tile)

    grid_i = _cdiv(n, tn)        # row tiles; partial last block masked (no x pad)
    grid_j = _cdiv(dout_p, tj)   # Dout tiles; 1 when the full weight fits resident

    flops = 2 * n * d_in * d_out
    bytes_accessed = (
        grid_j * n * d_in * act_bytes       # x read (re-streamed per Dout tile)
        + d_in * dout_p * w_bytes           # weight read
        + d_in * bias_bytes                 # bias read
        + n * dout_p * act_bytes            # output write
    )

    # TODO(synk): if a layer is large enough to be MXU-bound on v6e/v7x, pad
    # Dout/Din to 256 to fill the 256x256 MXU; irrelevant for memory-bound use.
    out2d = pl.pallas_call(
        _pw_kernel,
        out_shape=jax.ShapeDtypeStruct((n, dout_p), x.dtype),
        grid_spec=pl.GridSpec(
            # Outer axis = Dout tiles so a weight tile stays VMEM-resident
            # across the whole inner row sweep (re-fetched only per j).
            grid=(grid_j, grid_i),
            in_specs=[
                pl.BlockSpec((tn, d_in), lambda j, i: (i, 0)),   # x rows
                pl.BlockSpec((1, d_in), lambda j, i: (0, 0)),    # bias (resident)
                pl.BlockSpec((d_in, tj), lambda j, i: (0, j)),   # W cols
            ],
            out_specs=pl.BlockSpec((tn, tj), lambda j, i: (i, j)),
        ),
        compiler_params=pltpu.CompilerParams(
            dimension_semantics=("parallel", "parallel"),   # megacore sharding
            vmem_limit_bytes=vmem_limit,
        ),
        cost_estimate=pl.CostEstimate(
            flops=flops, transcendentals=0, bytes_accessed=bytes_accessed
        ),
    )(x2d, bias_p, w_p)

    out = out2d if dout_p == d_out else out2d[:, :d_out]
    return out.reshape(*lead_shape, d_out)


if __name__ == "__main__":
    # TODO(synk): dropout with p>0 (training-mode RNG mask) not implemented;
    # module default p=0.0 makes it the identity, matching eval semantics.
    input_size = 32
    output_size = 64
    batch, seq = 2, 8

    key = jax.random.PRNGKey(0)
    kx, kw = jax.random.split(key)

    x = jax.random.normal(kx, (batch, seq, input_size), dtype=jnp.float32)
    # Deterministic parameter init matching PWLayer.__init__ / _init_weights:
    #   bias = zeros(input_size); lin.weight ~ N(0, 0.02), shape (out, in)
    bias = jnp.zeros((input_size,), dtype=jnp.float32)
    weight = 0.02 * jax.random.normal(
        kw, (output_size, input_size), dtype=jnp.float32
    )

    # One-time param prep (pad Dout to lane width + pre-transpose), then forward.
    bias_p, w_p = prepare_pw_params(bias, weight)
    out = pw_layer_forward(x, bias_p, w_p, output_size)
    out = jax.block_until_ready(out)

    # Sanity check against plain-JAX reference.
    ref = (x - bias) @ weight.T
    assert out.shape == (batch, seq, output_size)
    assert jnp.allclose(out, ref, atol=1e-4, rtol=1e-4), float(
        jnp.max(jnp.abs(out - ref))
    )

    print("KERNEL_OK")
</pallas_src>

<mosaic_0001>
module attributes {stable_mosaic.version = 11 : i64} {
  func.func @_pw_kernel(%arg0: i32, %arg1: i32, %arg2: memref<8x32xf32, #tpu.memory_space<vmem>>, %arg3: memref<1x32xf32, #tpu.memory_space<vmem>>, %arg4: memref<32x128xf32, #tpu.memory_space<vmem>>, %arg5: memref<8x128xf32, #tpu.memory_space<vmem>>) attributes {dimension_semantics = [#tpu.dimension_semantics<parallel>, #tpu.dimension_semantics<parallel>], iteration_bounds = array<i64: 1, 2>, scalar_prefetch = 0 : i64, scratch_operands = 0 : i64, tpu.core_type = #tpu.core_type<tc>, window_params = [{transform_indices = @transform_0, window_bounds = array<i64: 8, 32>}, {pipeline_mode = #tpu.pipeline_mode<synchronous>, transform_indices = @transform_1, window_bounds = array<i64: 1, 32>}, {transform_indices = @transform_2, window_bounds = array<i64: 32, 128>}, {transform_indices = @transform_3, window_bounds = array<i64: 8, 128>}]} {
    %c0 = arith.constant 0 : index
    %c0_0 = arith.constant 0 : index
    %0 = vector.load %arg2[%c0, %c0_0] : memref<8x32xf32, #tpu.memory_space<vmem>>, vector<8x32xf32>
    %c0_1 = arith.constant 0 : index
    %c0_2 = arith.constant 0 : index
    %1 = vector.load %arg3[%c0_1, %c0_2] : memref<1x32xf32, #tpu.memory_space<vmem>>, vector<1x32xf32>
    %2 = vector.broadcast %1 : vector<1x32xf32> to vector<8x32xf32>
    %3 = arith.subf %0, %2 : vector<8x32xf32>
    %c0_3 = arith.constant 0 : index
    %c0_4 = arith.constant 0 : index
    %4 = vector.load %arg4[%c0_3, %c0_4] : memref<32x128xf32, #tpu.memory_space<vmem>>, vector<32x128xf32>
    %cst = arith.constant dense<0.000000e+00> : vector<8x128xf32>
    %5 = tpu.matmul %3, %4, %cst {dimension_numbers = #tpu.dot_dimension_numbers<[1], [0], [0], [1], [0, 0, 1, 1], [], []>} : vector<8x32xf32>, vector<32x128xf32>, vector<8x128xf32> -> vector<8x128xf32>
    %c0_5 = arith.constant 0 : index
    %c0_6 = arith.constant 0 : index
    %6 = vector.load %arg5[%c0_5, %c0_6] : memref<8x128xf32, #tpu.memory_space<vmem>>, vector<8x128xf32>
    tpu.vector_store %arg5[%c0_5, %c0_6], %5 {strides = array<i32>} : memref<8x128xf32, #tpu.memory_space<vmem>>, vector<8x128xf32>,
    return
  }
  func.func @transform_0(%arg0: i32, %arg1: i32) -> (i32, i32) {
    %c0_i32 = arith.constant 0 : i32
    %c0_i32_0 = arith.constant 0 : i32
    return %arg1, %c0_i32 : i32, i32
  }
  func.func @transform_1(%arg0: i32, %arg1: i32) -> (i32, i32) {
    %c0_i32 = arith.constant 0 : i32
    %c0_i32_0 = arith.constant 0 : i32
    %c0_i32_1 = arith.constant 0 : i32
    return %c0_i32, %c0_i32_0 : i32, i32
  }
  func.func @transform_2(%arg0: i32, %arg1: i32) -> (i32, i32) {
    %c0_i32 = arith.constant 0 : i32
    %c0_i32_0 = arith.constant 0 : i32
    return %c0_i32, %arg0 : i32, i32
  }
  func.func @transform_3(%arg0: i32, %arg1: i32) -> (i32, i32) {
    %c0_i32 = arith.constant 0 : i32
    return %arg1, %arg0 : i32, i32
  }
}

</mosaic_0001>

<llo_original>
// kernel: tpu_custom_call.1
$region0: #{tpu_custom_call.1}
  #allocation0 [shape = 'u32[]', space=smem, size = 0x4, offset = 0x4, fixed_abs, tag = 'smem constant byte address 0x4 - core index']
  #allocation1 [shape = 'u32[144,128]{1,0:T(1,128)}', space=vmem, size = 0x12000, scoped, tag = 'internal scratch']
  %s0 = inlined_call_operand.hbm [shape: f32[16,32], index: 0, kind: input, shape index: {}]
  %s1 = inlined_call_operand.vmem [shape: f32[1,32], index: 1, kind: input, shape index: {}]
  %s2 = inlined_call_operand.hbm [shape: f32[32,128], index: 2, kind: input, shape index: {}]
  %s3 = inlined_call_operand.hbm [shape: f32[16,128], index: 3, kind: output, shape index: {}]
  %s4 = sld [smem:[#allocation0]]
  $region53: #{tpu_custom_call.1} parent=0
    _
  %s6 = ssub.s32 1, %s4
  %s7 = scalar_select 0, %s6, %s4
  $region1: #{tpu_custom_call.1} parent=0
    #allocation2 [shape = 'u8[8192]{0}', space=vmem, size = 0x2000, scoped, tag = 'input window, operand 0']
    #allocation3 [shape = 's32[2]{0}', space=sflag, size = 0x8, scoped, tag = 'scoped memory for tpu_custom_call.1']
    #allocation4 [shape = 's32[2]{0}', space=sflag, size = 0x8, scoped, tag = 'scoped memory for tpu_custom_call.1']
    #allocation5 [shape = 'u8[16384]{0}', space=vmem, size = 0x4000, scoped, tag = 'input window, operand 2, single buffered']
    #allocation6 [shape = 's32[1]{0}', space=sflag, size = 0x4, scoped, tag = 'scoped memory for tpu_custom_call.1']
    #allocation7 [shape = 'u8[8192]{0}', space=vmem, size = 0x2000, scoped, tag = 'output window, operand 0']
    %8 = vsyncpa [#allocation3], 0
    %s9 = scalar_lea.sflag [#allocation3], 1
    %10 = vsyncpa %s9, 0
    %11 = vsyncpa [#allocation6], 0
    %12 = vsyncpa [#allocation4], 0
    %s13 = scalar_lea.sflag [#allocation4], 1
    %14 = vsyncpa %s13, 0
    loop: start=0, step=1, limit=4
    $region2: #{tpu_custom_call.1} parent=1 // loop_pre_header
      _
    $region3: #{tpu_custom_call.1} parent=1 // loop_header
      %s16 = sphi 0, %s20
      %p17 = scmp.ge.s32.totalorder %s16, 4
      %s23 = sphi 0, %s35
      %s24 = sphi 0, %s31
      %s25 = sphi 0, %s23
      %s26 = sphi 0, %s24
      %s27 = sphi 0, %s25
      %s28 = sphi 0, %s26
      %s38 = sphi 0, %s40
      %s41 = sphi 0, %s38
      %s42 = sphi 0, %s41
      %s58 = sphi 0, %s42
      %s62 = sphi 0, %s62
      %s64 = sphi 0, %s62
      %s65 = sphi 0, %s64
      %s79 = sphi 0, %s65
      %s85 = sphi 0, %s87
      %s88 = sphi 0, %s85
      %s89 = sphi 0, %s88
      %s105 = sphi 0, %s89
      %s113 = sphi 0, %s115
      %s116 = sphi 0, %s113
      %s117 = sphi 0, %s116
      %s133 = sphi 0, %s117
    $region4: #{tpu_custom_call.1} parent=1 // loop_header_branch
      %19 = sbr.rel (%p17) target = $region8
    $region5: #{tpu_custom_call.1} parent=1 // loop_body
      %s21 = ssub.s32 %s16, 1
      %s22 = ssub.s32 %s16, 2
      %s29 = sadd.s32 1, %s24
      %p30 = scmp.ge.s32.totalorder %s29, 2
      %s31 = scalar_select %p30, 0, %s29
      %s32 = sadd.s32 1, %s23
      %s33 = scalar_select %p30, %s32, %s23
      %p34 = scmp.ge.s32.totalorder %s33, 1
      %s35 = scalar_select %p34, 0, %s33
      %s36 = ssub.s32 %s24, %s31
      %p37 = scmp.eq.s32.totalorder %s36, 0
      %s39 = sadd.s32 %s38, 1
      %s40 = scalar_select %p37, %s38, %s39
      %p43 = pneg %p37
      %p44 = scmp.eq.s32.totalorder %s16, 1
      %p45 = por %p43, %p44
      %p46 = scmp.ne.s32.totalorder %s38, %s41
      %p47 = scmp.eq.s32.totalorder %s16, 0
      %p48 = por %p46, %p47
      %p49 = scmp.ne.s32.totalorder %s38, %s41
      %p50 = scmp.eq.s32.totalorder %s21, 1
      %p51 = por %p49, %p50
      %p52 = scmp.ne.s32.totalorder %s41, %s42
      %p53 = scmp.eq.s32.totalorder %s21, 0
      %p54 = por %p52, %p53
      %p55 = scmp.ne.s32.totalorder %s41, %s42
      %p56 = scmp.eq.s32.totalorder %s22, 1
      %p57 = por %p55, %p56
      %p59 = scmp.ne.s32.totalorder %s42, %s58
      %p60 = scmp.eq.s32.totalorder %s22, 0
      %p61 = por %p59, %p60
      %s63 = sadd.s32 %s62, 1
      %p66 = scmp.eq.s32.totalorder %s16, 1
      %p67 = scmp.ne.s32.totalorder %s62, %s64
      %p68 = scmp.eq.s32.totalorder %s16, 0
      %p69 = por %p67, %p68
      %p70 = scmp.ne.s32.totalorder %s62, %s64
      %p71 = scmp.eq.s32.totalorder %s21, 1
      %p72 = por %p70, %p71
      %p73 = scmp.ne.s32.totalorder %s64, %s65
      %p74 = scmp.eq.s32.totalorder %s21, 0
      %p75 = por %p73, %p74
      %p76 = scmp.ne.s32.totalorder %s64, %s65
      %p77 = scmp.eq.s32.totalorder %s22, 1
      %p78 = por %p76, %p77
      %p80 = scmp.ne.s32.totalorder %s65, %s79
      %p81 = scmp.eq.s32.totalorder %s22, 0
      %p82 = por %p80, %p81
      %s83 = ssub.s32 %s23, %s35
      %p84 = scmp.eq.s32.totalorder %s83, 0
      %s86 = sadd.s32 %s85, 1
      %s87 = scalar_select %p84, %s85, %s86
      %p90 = pneg %p84
      %p91 = scmp.eq.s32.totalorder %s16, 1
      %p92 = por %p90, %p91
      %p93 = scmp.ne.s32.totalorder %s85, %s88
      %p94 = scmp.eq.s32.totalorder %s16, 0
      %p95 = por %p93, %p94
      %p96 = scmp.ne.s32.totalorder %s85, %s88
      %p97 = scmp.eq.s32.totalorder %s21, 1
      %p98 = por %p96, %p97
      %p99 = scmp.ne.s32.totalorder %s88, %s89
      %p100 = scmp.eq.s32.totalorder %s21, 0
      %p101 = por %p99, %p100
      %p102 = scmp.ne.s32.totalorder %s88, %s89
      %p103 = scmp.eq.s32.totalorder %s22, 1
      %p104 = por %p102, %p103
      %p106 = scmp.ne.s32.totalorder %s89, %s105
      %p107 = scmp.eq.s32.totalorder %s22, 0
      %p108 = por %p106, %p107
      %s109 = ssub.s32 %s24, %s31
      %s110 = ssub.s32 %s23, %s35
      %s111 = sor.u32 %s109, %s110
      %p112 = scmp.eq.s32.totalorder %s111, 0
      %s114 = sadd.s32 %s113, 1
      %s115 = scalar_select %p112, %s113, %s114
      %p118 = pneg %p112
      %p119 = scmp.eq.s32.totalorder %s16, 1
      %p120 = por %p118, %p119
      %p121 = scmp.ne.s32.totalorder %s113, %s116
      %p122 = scmp.eq.s32.totalorder %s16, 0
      %p123 = por %p121, %p122
      %p124 = scmp.ne.s32.totalorder %s113, %s116
      %p125 = scmp.eq.s32.totalorder %s21, 1
      %p126 = por %p124, %p125
      %p127 = scmp.ne.s32.totalorder %s116, %s117
      %p128 = scmp.eq.s32.totalorder %s21, 0
      %p129 = por %p127, %p128
      %p130 = scmp.ne.s32.totalorder %s116, %s117
      %p131 = scmp.eq.s32.totalorder %s22, 1
      %p132 = por %p130, %p131
      %p134 = scmp.ne.s32.totalorder %s117, %s133
      %p135 = scmp.eq.s32.totalorder %s22, 0
      %p136 = por %p134, %p135
      %p137 = scmp.le.s32.totalorder 1, %s16
      %p138 = scmp.lt.s32.totalorder %s16, 3
      %p139 = pnand %p137, %p138
      %p140 = pneg %p139
      // Predicated region
      $region9: #{tpu_custom_call.1} parent=5 // pred_check
        _
      $region10: #{tpu_custom_call.1} parent=5 // pred_check_branch
        %142 = sbr.rel (%p139) target = $region12
      $region11: #{tpu_custom_call.1} parent=5 // pred_region
        %s143 = ssub.s32 %s16, 1
        // Predicated region
        $region13: #{tpu_custom_call.1} parent=11 // pred_check
          %p144 = pneg %p75
        $region14: #{tpu_custom_call.1} parent=11 // pred_check_branch
          %146 = sbr.rel (%p144) target = $region16
        $region15: #{tpu_custom_call.1} parent=11 // pred_region
          _
        $region16: #{tpu_custom_call.1} parent=11 // pred_fallthru
          _
        // Predicated region
        $region17: #{tpu_custom_call.1} parent=11 // pred_check
          %p147 = pneg %p101
        $region18: #{tpu_custom_call.1} parent=11 // pred_check_branch
          %149 = sbr.rel (%p147) target = $region20
        $region19: #{tpu_custom_call.1} parent=11 // pred_region
          %s151 = ssub.s32 512, 512
          %152 = vsyncadd [#allocation6], %s151
          %s153 = smul.addr %s25, 128
          %s154 = scalar_lea.hbm %s2, %s153
          %s155 = sshll.u32 [#allocation5], 4
          %s156 = int_to_ptr.vmem [resolvable:$true] %s155
          %161 = dma.hbm_to_vmem [thread:$0]  %s154, 512, %s156, [#allocation6], 128, 128, 8
        $region20: #{tpu_custom_call.1} parent=11 // pred_fallthru
          _
      $region12: #{tpu_custom_call.1} parent=5 // pred_fallthru
        _
      %p162 = scmp.lt.s32.totalorder %s16, 2
      // Predicated region
      $region21: #{tpu_custom_call.1} parent=5 // pred_check
        %p163 = pneg %p162
      $region22: #{tpu_custom_call.1} parent=5 // pred_check_branch
        %165 = sbr.rel (%p163) target = $region24
      $region23: #{tpu_custom_call.1} parent=5 // pred_region
        // Predicated region
        $region25: #{tpu_custom_call.1} parent=23 // pred_check
          %p166 = pneg %p48
        $region26: #{tpu_custom_call.1} parent=23 // pred_check_branch
          %168 = sbr.rel (%p166) target = $region28
        $region27: #{tpu_custom_call.1} parent=23 // pred_region
          %s169 = sand.u32 %s38, 1
          %s170 = scalar_lea.sflag [#allocation3], %s169
          %s171 = sand.u32 %s38, 1
          %s172 = smul.addr %s171, 8
          %s173 = scalar_lea.vmem [#allocation2], %s172
          %s175 = ssub.s32 128, 128
          %176 = vsyncadd %s170, %s175
          %s177 = smul.addr %s24, 128
          %s178 = scalar_lea.hbm %s0, %s177
          %s180 = sshll.u32 %s173, 4
          %s181 = int_to_ptr.vmem [resolvable:$true] %s180
          %183 = dma.hbm_to_vmem [thread:$0]  %s178, 128, %s181, %s170
        $region28: #{tpu_custom_call.1} parent=23 // pred_fallthru
          _
      $region24: #{tpu_custom_call.1} parent=5 // pred_fallthru
        _
      %p184 = scmp.le.s32.totalorder 1, %s16
      %p185 = scmp.lt.s32.totalorder %s16, 3
      %p186 = pnand %p184, %p185
      %p187 = pneg %p186
      // Predicated region
      $region29: #{tpu_custom_call.1} parent=5 // pred_check
        _
      $region30: #{tpu_custom_call.1} parent=5 // pred_check_branch
        %189 = sbr.rel (%p186) target = $region32
      $region31: #{tpu_custom_call.1} parent=5 // pred_region
        %s190 = ssub.s32 %s16, 1
        %s191 = sand.u32 %s41, 1
        %s192 = scalar_lea.sflag [#allocation3], %s191
        %s193 = sand.u32 %s41, 1
        %s194 = smul.addr %s193, 8
        %s195 = scalar_lea.vmem [#allocation2], %s194
        // Predicated region
        $region33: #{tpu_custom_call.1} parent=31 // pred_check
          %p196 = pneg %p54
        $region34: #{tpu_custom_call.1} parent=31 // pred_check_branch
          %198 = sbr.rel (%p196) target = $region36
        $region35: #{tpu_custom_call.1} parent=31 // pred_region
          %199 = dma.done %s192, 128
        $region36: #{tpu_custom_call.1} parent=31 // pred_fallthru
          _
        // Predicated region
        $region37: #{tpu_custom_call.1} parent=31 // pred_check
          %p200 = pneg %p101
        $region38: #{tpu_custom_call.1} parent=31 // pred_check_branch
          %202 = sbr.rel (%p200) target = $region40
        $region39: #{tpu_custom_call.1} parent=31 // pred_region
          %203 = dma.done [#allocation6], 512
        $region40: #{tpu_custom_call.1} parent=31 // pred_fallthru
          _
        %s204 = sand.u32 %s41, 1
        %s205 = scalar_lea.sflag [#allocation3], %s204
        %s206 = sand.u32 %s41, 1
        %s207 = smul.addr %s206, 8
        %s208 = scalar_lea.vmem [#allocation2], %s207
        %p209 = pneg %p54
        %p210 = pneg %p51
        %p211 = pneg %p75
        %p212 = pneg %p72
        %p213 = pneg %p101
        %p214 = pneg %p98
        %p215 = pneg %p129
        %p216 = pneg %p126
        %s217 = sand.u32 %s116, 1
        %s218 = scalar_lea.sflag [#allocation4], %s217
        %s219 = sand.u32 %s116, 1
        %s220 = smul.addr %s219, 8
        %s221 = scalar_lea.vmem [#allocation7], %s220
        %v222 = vld [vmem:[%s195] sm:$0xff]
        %v223 = vld [vmem:[%s1] sm:$0x1]
        %v225 = vlaneseq
        %v226 = vshrl.u32 %v225, 7
        %v227 = vsub.s32 0, %v226
        %v228 = vrot.slane %v223, %v227
        %v230 = vsub.f32 %v222, %v228
        %v231 = vld [vmem:[#allocation5] sm:$0xff]
        %v232 = vld [vmem:[#allocation5 + $0x8] sm:$0xff]
        %v233 = vld [vmem:[#allocation5 + $0x10] sm:$0xff]
        %v234 = vld [vmem:[#allocation5 + $0x18] sm:$0xff]
        %vm235 = vcmask 261120
        %v237 = vsel %vm235, %v230, 0
        %239 = vmatprep.subr.mxu0 0.0
        %240 = vmatpush1.msra.mxu0 %v231
        %241 = vmatprep.subr.mxu0 0.0
        %242 = vmatpush1.msra.mxu0 %v232
        %243 = vmatprep.subr.mxu0 0.0
        %244 = vmatpush1.msra.mxu0 %v233
        %245 = vmatprep.subr.mxu0 0.0
        %246 = vmatpush1.msra.mxu0 %v234
        %247 = vmatprep.subr.mxu0 0.0
        %248 = vmatpush1.msra.mxu0 0.0
        %249 = vmatprep.subr.mxu0 0.0
        %250 = vmatpush1.msra.mxu0 0.0
        %251 = vmatprep.subr.mxu0 0.0
        %252 = vmatpush1.msra.mxu0 0.0
        %253 = vmatprep.subr.mxu0 0.0
        %254 = vmatpush1.msra.mxu0 0.0
        %255 = vmatprep.subr.mxu0 0.0
        %256 = vmatpush1.msra.mxu0 0.0
        %257 = vmatprep.subr.mxu0 0.0
        %258 = vmatpush1.msra.mxu0 0.0
        %259 = vmatprep.subr.mxu0 0.0
        %260 = vmatpush1.msra.mxu0 0.0
        %261 = vmatprep.subr.mxu0 0.0
        %262 = vmatpush1.msra.mxu0 0.0
        %263 = vmatprep.subr.mxu0 0.0
        %264 = vmatpush1.msra.mxu0 0.0
        %265 = vmatprep.subr.mxu0 0.0
        %266 = vmatpush1.msra.mxu0 0.0
        %267 = vmatprep.subr.mxu0 0.0
        %268 = vmatpush1.msra.mxu0 0.0
        %269 = vmatprep.subr.mxu0 0.0
        %270 = vmatpush1.msra.mxu0 0.0
        %271 = vmatprep.subr.mxu0 0.0
        %272 = vmatpush1.msra.mxu0 0.0
        %273 = vmatprep.subr.mxu0 0.0
        %274 = vmatpush1.msra.mxu0 0.0
        %275 = vmatprep.subr.mxu0 0.0
        %276 = vmatpush1.msra.mxu0 0.0
        %277 = vmatprep.subr.mxu0 0.0
        %278 = vmatpush1.msra.mxu0 0.0
        %279 = vmatprep.subr.mxu0 0.0
        %280 = vmatpush1.msra.mxu0 0.0
        %281 = vmatprep.subr.mxu0 0.0
        %282 = vmatpush1.msra.mxu0 0.0
        %283 = vmatprep.subr.mxu0 0.0
        %284 = vmatpush1.msra.mxu0 0.0
        %285 = vmatprep.subr.mxu0 0.0
        %286 = vmatpush1.msra.mxu0 0.0
        %287 = vmatprep.subr.mxu0 0.0
        %288 = vmatpush1.msra.mxu0 0.0
        %289 = vmatprep.subr.mxu0 0.0
        %290 = vmatpush1.msra.mxu0 0.0
        %291 = vmatprep.subr.mxu0 0.0
        %292 = vmatpush1.msra.mxu0 0.0
        %293 = vmatprep.subr.mxu0 0.0
        %294 = vmatpush1.msra.mxu0 0.0
        %295 = vmatprep.subr.mxu0 0.0
        %296 = vmatpush1.msra.mxu0 0.0
        %297 = vmatprep.subr.mxu0 0.0
        %298 = vmatpush1.msra.mxu0 0.0
        %299 = vmatprep.subr.mxu0 0.0
        %300 = vmatpush1.msra.mxu0 0.0
        %301 = vmatprep.subr.mxu0 0.0
        %302 = vmatpush1.msra.mxu0 0.0
        %303 = vmatprep.mubr.f32.mxu0 0.0
        %304 = vmatmul.mubr.f32.gmra.mrb[0].mxu0 %v237
        %v305 = vpop.f32.mrb[0].mxu0
        %v306 = vadd.f32 0.0, %v305
        %v307 = vpop.f32.mrb[0].mxu0
        %308 = vdwg.mxu0
        %309 = vst [vmem:[%s221] sm:$0xff] %v306
        %s310 = sand.u32 %s116, 1
        %s311 = scalar_lea.sflag [#allocation4], %s310
        %s312 = sand.u32 %s116, 1
        %s313 = smul.addr %s312, 8
        %s314 = scalar_lea.vmem [#allocation7], %s313
        // Predicated region
        $region41: #{tpu_custom_call.1} parent=31 // pred_check
          %p315 = pneg %p126
        $region42: #{tpu_custom_call.1} parent=31 // pred_check_branch
          %317 = sbr.rel (%p315) target = $region44
        $region43: #{tpu_custom_call.1} parent=31 // pred_region
          %s319 = ssub.s32 128, 128
          %320 = vsyncadd %s311, %s319
          %s321 = sadd.s32 %s25, %s26
          %s322 = smul.addr %s321, 128
          %s323 = scalar_lea.hbm %s3, %s322
          %s325 = sshll.u32 %s314, 4
          %s326 = int_to_ptr.vmem [resolvable:$true] %s325
          %328 = dma.vmem_to_hbm [thread:$0]  %s326, 128, %s323, %s311
        $region44: #{tpu_custom_call.1} parent=31 // pred_fallthru
          _
      $region32: #{tpu_custom_call.1} parent=5 // pred_fallthru
        _
      %p329 = scmp.le.s32.totalorder 2, %s16
      // Predicated region
      $region45: #{tpu_custom_call.1} parent=5 // pred_check
        %p330 = pneg %p329
      $region46: #{tpu_custom_call.1} parent=5 // pred_check_branch
        %332 = sbr.rel (%p330) target = $region48
      $region47: #{tpu_custom_call.1} parent=5 // pred_region
        %s333 = ssub.s32 %s16, 2
        // Predicated region
        $region49: #{tpu_custom_call.1} parent=47 // pred_check
          %p334 = pneg %p132
        $region50: #{tpu_custom_call.1} parent=47 // pred_check_branch
          %336 = sbr.rel (%p334) target = $region52
        $region51: #{tpu_custom_call.1} parent=47 // pred_region
          %s337 = sand.u32 %s117, 1
          %s338 = scalar_lea.sflag [#allocation4], %s337
          %s339 = sand.u32 %s117, 1
          %s340 = smul.addr %s339, 8
          %s341 = scalar_lea.vmem [#allocation7], %s340
          %342 = dma.done %s338, 128
        $region52: #{tpu_custom_call.1} parent=47 // pred_fallthru
          _
      $region48: #{tpu_custom_call.1} parent=5 // pred_fallthru
        _
    $region6: #{tpu_custom_call.1} parent=1 // loop_footer
      %s20 = sadd.s32 1, %s16
    $region7: #{tpu_custom_call.1} parent=1 // loop_footer_branch
      %15 = sbr.rel target = $region3
    $region8: #{tpu_custom_call.1} parent=1 // loop_exit
      _
    %343 = vsyncpa [#allocation3], 1
    %s344 = scalar_lea.sflag [#allocation3], 1
    %345 = vsyncpa %s344, 1
    %346 = vsyncpa [#allocation6], 1
    %347 = vsyncpa [#allocation4], 1
    %s348 = scalar_lea.sflag [#allocation4], 1
    %349 = vsyncpa %s348, 1

</llo_original>
